<compile_context>
chip_gen: v7x
topology: tpu7x:2x2x1
jax: 0.10.0
libtpu: 0.0.40
codegen_flags: <defaults>
</compile_context>

<pallas_src>
import functools

import jax
import jax.numpy as jnp
import numpy as np
from jax.experimental import pallas as pl
from jax.experimental.pallas import tpu as pltpu  # noqa: F401

# ---- module config (small shapes consistent with the PyTorch module) ----
IN_CH = 32
OUT_CH = 32                  # same_in_out_chs -> the K conv uses stride 1
INTER_CH = 64
NUM_HEADS = 8                # OUT_CH % NUM_HEADS == 0
D_HEAD = INTER_CH // NUM_HEADS
B, H, W = 2, 8, 16
N = H * W                    # 128 -> each per-batch spatial slab is one lane group
BN_EPS = 1e-5                # nn.BatchNorm2d default


def _ext_attn_kernel(x_ref, k_ref, v_ref, o_ref, *, batch, n, num_heads, d_head):
    """x_ref: (C_in, batch*n)   input, batch packed into the lane axis
       k_ref: (inter, C_in)     1x1 conv weight K with the BN scale folded in
       v_ref: (C_out, inter)    1x1 conv weight V
       o_ref: (C_out, batch*n)  output."""
    inter = num_heads * d_head

    # 1x1 conv with K: one MXU matmul over the full batch*spatial lane axis.
    qk = jnp.dot(k_ref[...], x_ref[...],
                 preferred_element_type=jnp.float32)          # (inter, batch*n)

    # _act_dn, per batch element (static slices; lane-aligned when n % 128 == 0).
    parts = []
    for b in range(batch):
        q = qk[:, b * n:(b + 1) * n]                          # (inter, n)
        # softmax over the spatial axis
        m = jnp.max(q, axis=-1, keepdims=True)
        e = jnp.exp(q - m)
        inv_l = pl.reciprocal(jnp.sum(e, axis=-1, keepdims=True))  # exact (approx=True -> EUP)
        p = e * inv_l
        # divide by (sum over channels-within-head + 1e-6)
        p3 = p.reshape(num_heads, d_head, n)
        den = jnp.sum(p3, axis=1, keepdims=True) + 1e-6       # (num_heads, 1, n)
        p3 = p3 * pl.reciprocal(den)
        parts.append(p3.reshape(inter, n))
    p_all = parts[0] if batch == 1 else jnp.concatenate(parts, axis=-1)  # (inter, batch*n)

    # 1x1 conv with V: one MXU matmul, full-width RHS.
    out = jnp.dot(v_ref[...], p_all, preferred_element_type=jnp.float32)
    o_ref[...] = out.astype(o_ref.dtype)


def external_attention(x_nchw, k_w, v_w, bn_scale, bn_bias, num_heads=NUM_HEADS):
    """ExternalAttention.forward (use_cross_kv=False, eval-mode BN).

    x_nchw:   (B, C_in, H, W) float32
    k_w:      (inter, C_in)   -- the (inter, C_in, 1, 1) conv weight, squeezed
    v_w:      (C_out, inter)  -- the (C_out, inter, 1, 1) conv weight, squeezed
    bn_scale: (C_in,) = gamma / sqrt(running_var + eps)
    bn_bias:  (C_in,) = beta - running_mean * bn_scale   (cancels -> unused)
    returns   (B, C_out, H, W) float32
    """
    Bb, C, Hh, Ww = x_nchw.shape
    n = Hh * Ww
    inter = k_w.shape[0]
    out_ch = v_w.shape[0]
    assert out_ch % num_heads == 0 and inter % num_heads == 0
    d_head = inter // num_heads

    # Fold the eval-mode BatchNorm into K:  K @ (s*x + b) = (K*s) @ x + (K @ b).
    # The (K @ b) term is constant over the spatial axis, so it cancels exactly
    # under the spatial softmax in _act_dn -> drop the bias path entirely.
    k_folded = (k_w * bn_scale[None, :]).astype(jnp.float32)
    del bn_bias  # exactly cancelled by softmax shift-invariance

    # Pack batch into the lane axis: (C_in, B*n), spatial last (lane-dense).
    x2 = x_nchw.reshape(Bb, C, n).transpose(1, 0, 2).reshape(C, Bb * n)

    out2 = pl.pallas_call(
        functools.partial(_ext_attn_kernel, batch=Bb, n=n,
                          num_heads=num_heads, d_head=d_head),
        out_shape=jax.ShapeDtypeStruct((out_ch, Bb * n), jnp.float32),
        # Single invocation, no grid: the whole working set fits in VMEM, so there
        # is no per-batch pipeline/grid-step overhead and both matmuls see the full
        # 256-wide RHS.  For large production batches, reintroduce a batch grid
        # axis (mark it pltpu.CORE_PARALLEL on v7x to shard across TensorCores).
    )(x2, k_folded, v_w)

    return (out2.reshape(out_ch, Bb, n).transpose(1, 0, 2)
                .reshape(Bb, out_ch, Hh, Ww))


def reference_forward(x_nchw, k_w, v_w, bn_scale, bn_bias, *, fold_bn, precision=None):
    """Pure-JAX forward.  fold_bn=False is the faithful PyTorch-module math
    (BN affine on x, then 1x1 convs); fold_bn=True is the algebraically
    equivalent folded form that the kernel computes."""
    Bb, C, Hh, Ww = x_nchw.shape
    n = Hh * Ww
    inter = k_w.shape[0]
    out_ch = v_w.shape[0]
    x = x_nchw.reshape(Bb, C, n).astype(jnp.float32)
    if fold_bn:
        kw = k_w * bn_scale[None, :]
    else:
        x = x * bn_scale.reshape(1, C, 1) + bn_bias.reshape(1, C, 1)
        kw = k_w
    qk = jnp.einsum('ic,bcn->bin', kw, x, precision=precision)
    p = jax.nn.softmax(qk, axis=-1)
    p3 = p.reshape(Bb, NUM_HEADS, inter // NUM_HEADS, n)
    p3 = p3 / (jnp.sum(p3, axis=2, keepdims=True) + 1e-6)
    p = p3.reshape(Bb, inter, n)
    out = jnp.einsum('oi,bin->bon', v_w, p, precision=precision)
    return out.reshape(Bb, out_ch, Hh, Ww)


if __name__ == "__main__":
    key = jax.random.PRNGKey(0)
    kx, kk, kv, kg, kb, km, kvar = jax.random.split(key, 7)

    # input (NCHW)
    x = jax.random.normal(kx, (B, IN_CH, H, W), dtype=jnp.float32)

    # 1x1 conv weights (PyTorch shapes (C_out, C_in, 1, 1), stored squeezed)
    k_w = 0.1 * jax.random.normal(kk, (INTER_CH, IN_CH), dtype=jnp.float32)
    v_w = 0.1 * jax.random.normal(kv, (OUT_CH, INTER_CH), dtype=jnp.float32)

    # BatchNorm2d params (eval mode), folded into per-channel scale/bias
    gamma = 1.0 + 0.1 * jax.random.normal(kg, (IN_CH,), dtype=jnp.float32)
    beta = 0.1 * jax.random.normal(kb, (IN_CH,), dtype=jnp.float32)
    run_mean = 0.1 * jax.random.normal(km, (IN_CH,), dtype=jnp.float32)
    run_var = 1.0 + 0.1 * jnp.abs(jax.random.normal(kvar, (IN_CH,), dtype=jnp.float32))
    bn_scale = gamma / jnp.sqrt(run_var + BN_EPS)
    bn_bias = beta - run_mean * bn_scale

    out = jax.block_until_ready(external_attention(x, k_w, v_w, bn_scale, bn_bias))

    # (1) Kernel vs the identical folded math in plain XLA at default matmul
    #     precision (matched operand values/rounding) -> validates kernel mechanics.
    ref_folded = reference_forward(x, k_w, v_w, bn_scale, bn_bias, fold_bn=True)
    np.testing.assert_allclose(np.asarray(out), np.asarray(ref_folded),
                               rtol=1e-4, atol=1e-5)

    # (2) Folded math vs the faithful module forward (BN scale+bias, then convs) at
    #     f32-accurate 'highest' precision -> proves the BN fold preserves the
    #     original module semantics (the bias cancels under the spatial softmax).
    hi = jax.lax.Precision.HIGHEST
    ref_folded_hi = reference_forward(x, k_w, v_w, bn_scale, bn_bias,
                                      fold_bn=True, precision=hi)
    ref_module_hi = reference_forward(x, k_w, v_w, bn_scale, bn_bias,
                                      fold_bn=False, precision=hi)
    np.testing.assert_allclose(np.asarray(ref_folded_hi), np.asarray(ref_module_hi),
                               rtol=1e-4, atol=1e-5)

    print("KERNEL_OK")
</pallas_src>

<mosaic_0001>
module attributes {stable_mosaic.version = 11 : i64} {
  func.func @_ext_attn_kernel(%arg0: memref<32x256xf32, #tpu.memory_space<vmem>>, %arg1: memref<64x32xf32, #tpu.memory_space<vmem>>, %arg2: memref<32x64xf32, #tpu.memory_space<vmem>>, %arg3: memref<32x256xf32, #tpu.memory_space<vmem>>) attributes {dimension_semantics = [], scalar_prefetch = 0 : i64, scratch_operands = 0 : i64, tpu.core_type = #tpu.core_type<tc>} {
    %c0 = arith.constant 0 : index
    %c0_0 = arith.constant 0 : index
    %0 = vector.load %arg1[%c0, %c0_0] : memref<64x32xf32, #tpu.memory_space<vmem>>, vector<64x32xf32>
    %c0_1 = arith.constant 0 : index
    %c0_2 = arith.constant 0 : index
    %1 = vector.load %arg0[%c0_1, %c0_2] : memref<32x256xf32, #tpu.memory_space<vmem>>, vector<32x256xf32>
    %cst = arith.constant dense<0.000000e+00> : vector<64x256xf32>
    %2 = tpu.matmul %0, %1, %cst {dimension_numbers = #tpu.dot_dimension_numbers<[1], [0], [0], [1], [0, 0, 1, 1], [], []>} : vector<64x32xf32>, vector<32x256xf32>, vector<64x256xf32> -> vector<64x256xf32>
    %3 = vector.extract_strided_slice %2 {offsets = [0, 0], sizes = [64, 128], strides = [1, 1]} : vector<64x256xf32> to vector<64x128xf32>
    %cst_3 = arith.constant dense<0xFF800000> : vector<64xf32>
    %4 = vector.multi_reduction <maximumf>, %3, %cst_3 [1] : vector<64x128xf32> to vector<64xf32>
    %5 = vector.shape_cast %4 : vector<64xf32> to vector<64x1xf32>
    %6 = vector.broadcast %5 : vector<64x1xf32> to vector<64x128xf32>
    %7 = arith.subf %3, %6 : vector<64x128xf32>
    %8 = math.exp %7 : vector<64x128xf32>
    %cst_4 = arith.constant dense<0.000000e+00> : vector<64xf32>
    %9 = vector.multi_reduction <add>, %8, %cst_4 [1] : vector<64x128xf32> to vector<64xf32>
    %10 = vector.shape_cast %9 : vector<64xf32> to vector<64x1xf32>
    %11 = tpu.reciprocal %10 : vector<64x1xf32> -> vector<64x1xf32>
    %12 = vector.broadcast %11 : vector<64x1xf32> to vector<64x128xf32>
    %13 = arith.mulf %8, %12 : vector<64x128xf32>
    %14 = vector.shape_cast %13 : vector<64x128xf32> to vector<8x8x128xf32>
    %cst_5 = arith.constant dense<0.000000e+00> : vector<8x128xf32>
    %15 = vector.multi_reduction <add>, %14, %cst_5 [1] : vector<8x8x128xf32> to vector<8x128xf32>
    %16 = vector.shape_cast %15 : vector<8x128xf32> to vector<8x1x128xf32>
    %cst_6 = arith.constant 9.99999997E-7 : f32
    %17 = vector.broadcast %cst_6 : f32 to vector<8x1x128xf32>
    %18 = arith.addf %16, %17 : vector<8x1x128xf32>
    %19 = tpu.reciprocal %18 : vector<8x1x128xf32> -> vector<8x1x128xf32>
    %20 = vector.broadcast %19 : vector<8x1x128xf32> to vector<8x8x128xf32>
    %21 = arith.mulf %14, %20 : vector<8x8x128xf32>
    %22 = vector.shape_cast %21 : vector<8x8x128xf32> to vector<64x128xf32>
    %23 = vector.extract_strided_slice %2 {offsets = [0, 128], sizes = [64, 128], strides = [1, 1]} : vector<64x256xf32> to vector<64x128xf32>
    %cst_7 = arith.constant dense<0xFF800000> : vector<64xf32>
    %24 = vector.multi_reduction <maximumf>, %23, %cst_7 [1] : vector<64x128xf32> to vector<64xf32>
    %25 = vector.shape_cast %24 : vector<64xf32> to vector<64x1xf32>
    %26 = vector.broadcast %25 : vector<64x1xf32> to vector<64x128xf32>
    %27 = arith.subf %23, %26 : vector<64x128xf32>
    %28 = math.exp %27 : vector<64x128xf32>
    %cst_8 = arith.constant dense<0.000000e+00> : vector<64xf32>
    %29 = vector.multi_reduction <add>, %28, %cst_8 [1] : vector<64x128xf32> to vector<64xf32>
    %30 = vector.shape_cast %29 : vector<64xf32> to vector<64x1xf32>
    %31 = tpu.reciprocal %30 : vector<64x1xf32> -> vector<64x1xf32>
    %32 = vector.broadcast %31 : vector<64x1xf32> to vector<64x128xf32>
    %33 = arith.mulf %28, %32 : vector<64x128xf32>
    %34 = vector.shape_cast %33 : vector<64x128xf32> to vector<8x8x128xf32>
    %cst_9 = arith.constant dense<0.000000e+00> : vector<8x128xf32>
    %35 = vector.multi_reduction <add>, %34, %cst_9 [1] : vector<8x8x128xf32> to vector<8x128xf32>
    %36 = vector.shape_cast %35 : vector<8x128xf32> to vector<8x1x128xf32>
    %cst_10 = arith.constant 9.99999997E-7 : f32
    %37 = vector.broadcast %cst_10 : f32 to vector<8x1x128xf32>
    %38 = arith.addf %36, %37 : vector<8x1x128xf32>
    %39 = tpu.reciprocal %38 : vector<8x1x128xf32> -> vector<8x1x128xf32>
    %40 = vector.broadcast %39 : vector<8x1x128xf32> to vector<8x8x128xf32>
    %41 = arith.mulf %34, %40 : vector<8x8x128xf32>
    %42 = vector.shape_cast %41 : vector<8x8x128xf32> to vector<64x128xf32>
    %43 = tpu.concatenate %22, %42 in 1 : vector<64x128xf32>, vector<64x128xf32> -> vector<64x256xf32>
    %c0_11 = arith.constant 0 : index
    %c0_12 = arith.constant 0 : index
    %44 = vector.load %arg2[%c0_11, %c0_12] : memref<32x64xf32, #tpu.memory_space<vmem>>, vector<32x64xf32>
    %cst_13 = arith.constant dense<0.000000e+00> : vector<32x256xf32>
    %45 = tpu.matmul %44, %43, %cst_13 {dimension_numbers = #tpu.dot_dimension_numbers<[1], [0], [0], [1], [0, 0, 1, 1], [], []>} : vector<32x64xf32>, vector<64x256xf32>, vector<32x256xf32> -> vector<32x256xf32>
    %c0_14 = arith.constant 0 : index
    %c0_15 = arith.constant 0 : index
    %46 = vector.load %arg3[%c0_14, %c0_15] : memref<32x256xf32, #tpu.memory_space<vmem>>, vector<32x256xf32>
    tpu.vector_store %arg3[%c0_14, %c0_15], %45 {strides = array<i32>} : memref<32x256xf32, #tpu.memory_space<vmem>>, vector<32x256xf32>,
    return
  }
}

</mosaic_0001>

<llo_original>
// kernel: tpu_custom_call.1
$region0: #{tpu_custom_call.1}
  #allocation0 [shape = 'u32[]', space=smem, size = 0x4, offset = 0x4, fixed_abs, tag = 'smem constant byte address 0x4 - core index']
  #allocation1 [shape = 'u32[144,128]{1,0:T(1,128)}', space=vmem, size = 0x12000, scoped, tag = 'internal scratch']
  %s0 = inlined_call_operand.vmem [shape: f32[32,256], index: 0, kind: input, shape index: {}]
  %s1 = inlined_call_operand.vmem [shape: f32[64,32], index: 1, kind: input, shape index: {}]
  %s2 = inlined_call_operand.vmem [shape: f32[32,64], index: 2, kind: input, shape index: {}]
  %s3 = inlined_call_operand.hbm [shape: f32[32,256], index: 3, kind: output, shape index: {}]
  %s4 = sld [smem:[#allocation0]]
  $region22: #{tpu_custom_call.1} parent=0
    _
  %s6 = ssub.s32 1, %s4
  %s7 = scalar_select 0, %s6, %s4
  $region1: #{tpu_custom_call.1} parent=0
    #allocation2 [shape = 'u8[32768]{0}', space=vmem, size = 0x8000, scoped, tag = 'output window, operand 0, single buffered']
    #allocation3 [shape = 's32[1]{0}', space=sflag, size = 0x4, scoped, tag = 'scoped memory for tpu_custom_call.1']
    %8 = vsyncpa [#allocation3], 0
    // Predicated region
    $region2: #{tpu_custom_call.1} parent=1 // pred_check
      _
    $region3: #{tpu_custom_call.1} parent=1 // pred_check_branch
      %10 = sbr.rel (0) target = $region5
    $region4: #{tpu_custom_call.1} parent=1 // pred_region
      _
    $region5: #{tpu_custom_call.1} parent=1 // pred_fallthru
      _
    // Predicated region
    $region6: #{tpu_custom_call.1} parent=1 // pred_check
      _
    $region7: #{tpu_custom_call.1} parent=1 // pred_check_branch
      %12 = sbr.rel (0) target = $region9
    $region8: #{tpu_custom_call.1} parent=1 // pred_region
      _
    $region9: #{tpu_custom_call.1} parent=1 // pred_fallthru
      _
    // Predicated region
    $region10: #{tpu_custom_call.1} parent=1 // pred_check
      _
    $region11: #{tpu_custom_call.1} parent=1 // pred_check_branch
      %14 = sbr.rel (0) target = $region13
    $region12: #{tpu_custom_call.1} parent=1 // pred_region
      _
    $region13: #{tpu_custom_call.1} parent=1 // pred_fallthru
      _
    %v15 = vld [vmem:[%s1] sm:$0xff]
    %v16 = vld [vmem:[%s1 + $0x8] sm:$0xff]
    %v17 = vld [vmem:[%s1 + $0x10] sm:$0xff]
    %v18 = vld [vmem:[%s1 + $0x18] sm:$0xff]
    %v19 = vld [vmem:[%s1 + $0x20] sm:$0xff]
    %v20 = vld [vmem:[%s1 + $0x28] sm:$0xff]
    %v21 = vld [vmem:[%s1 + $0x30] sm:$0xff]
    %v22 = vld [vmem:[%s1 + $0x38] sm:$0xff]
    %v23 = vld [vmem:[%s0] sm:$0xff]
    %v24 = vld [vmem:[%s0 + $0x8] sm:$0xff]
    %v25 = vld [vmem:[%s0 + $0x10] sm:$0xff]
    %v26 = vld [vmem:[%s0 + $0x18] sm:$0xff]
    %v27 = vld [vmem:[%s0 + $0x20] sm:$0xff]
    %v28 = vld [vmem:[%s0 + $0x28] sm:$0xff]
    %v29 = vld [vmem:[%s0 + $0x30] sm:$0xff]
    %v30 = vld [vmem:[%s0 + $0x38] sm:$0xff]
    %vm31 = vcmask 261120
    %v33 = vsel %vm31, %v15, 0
    %v36 = vsel %vm31, %v16, 0
    %v39 = vsel %vm31, %v17, 0
    %v42 = vsel %vm31, %v18, 0
    %v45 = vsel %vm31, %v19, 0
    %v48 = vsel %vm31, %v20, 0
    %v51 = vsel %vm31, %v21, 0
    %v54 = vsel %vm31, %v22, 0
    %56 = vmatprep.subr.mxu0 %v24
    %57 = vmatpush1.msra.mxu0 %v23
    %58 = vmatprep.subr.mxu0 %v26
    %59 = vmatpush1.msra.mxu0 %v25
    %60 = vmatprep.subr.mxu0 %v28
    %61 = vmatpush1.msra.mxu0 %v27
    %62 = vmatprep.subr.mxu0 %v30
    %63 = vmatpush1.msra.mxu0 %v29
    %64 = vmatprep.subr.mxu0 0.0
    %65 = vmatpush1.msra.mxu0 0.0
    %66 = vmatprep.subr.mxu0 0.0
    %67 = vmatpush1.msra.mxu0 0.0
    %68 = vmatprep.subr.mxu0 0.0
    %69 = vmatpush1.msra.mxu0 0.0
    %70 = vmatprep.subr.mxu0 0.0
    %71 = vmatpush1.msra.mxu0 0.0
    %72 = vmatprep.subr.mxu0 0.0
    %73 = vmatpush1.msra.mxu0 0.0
    %74 = vmatprep.subr.mxu0 0.0
    %75 = vmatpush1.msra.mxu0 0.0
    %76 = vmatprep.subr.mxu0 0.0
    %77 = vmatpush1.msra.mxu0 0.0
    %78 = vmatprep.subr.mxu0 0.0
    %79 = vmatpush1.msra.mxu0 0.0
    %80 = vmatprep.subr.mxu0 0.0
    %81 = vmatpush1.msra.mxu0 0.0
    %82 = vmatprep.subr.mxu0 0.0
    %83 = vmatpush1.msra.mxu0 0.0
    %84 = vmatprep.subr.mxu0 0.0
    %85 = vmatpush1.msra.mxu0 0.0
    %86 = vmatprep.subr.mxu0 0.0
    %87 = vmatpush1.msra.mxu0 0.0
    %88 = vmatprep.subr.mxu0 0.0
    %89 = vmatpush1.msra.mxu0 0.0
    %90 = vmatprep.subr.mxu0 0.0
    %91 = vmatpush1.msra.mxu0 0.0
    %92 = vmatprep.subr.mxu0 0.0
    %93 = vmatpush1.msra.mxu0 0.0
    %94 = vmatprep.subr.mxu0 0.0
    %95 = vmatpush1.msra.mxu0 0.0
    %96 = vmatprep.subr.mxu0 0.0
    %97 = vmatpush1.msra.mxu0 0.0
    %98 = vmatprep.subr.mxu0 0.0
    %99 = vmatpush1.msra.mxu0 0.0
    %100 = vmatprep.subr.mxu0 0.0
    %101 = vmatpush1.msra.mxu0 0.0
    %102 = vmatprep.subr.mxu0 0.0
    %103 = vmatpush1.msra.mxu0 0.0
    %104 = vmatprep.subr.mxu0 0.0
    %105 = vmatpush1.msra.mxu0 0.0
    %106 = vmatprep.subr.mxu0 0.0
    %107 = vmatpush1.msra.mxu0 0.0
    %108 = vmatprep.subr.mxu0 0.0
    %109 = vmatpush1.msra.mxu0 0.0
    %110 = vmatprep.subr.mxu0 0.0
    %111 = vmatpush1.msra.mxu0 0.0
    %112 = vmatprep.subr.mxu0 0.0
    %113 = vmatpush1.msra.mxu0 0.0
    %114 = vmatprep.subr.mxu0 0.0
    %115 = vmatpush1.msra.mxu0 0.0
    %116 = vmatprep.subr.mxu0 0.0
    %117 = vmatpush1.msra.mxu0 0.0
    %118 = vmatprep.subr.mxu0 0.0
    %119 = vmatpush1.msra.mxu0 0.0
    %120 = vmatprep.mubr.f32.mxu0 0.0
    %121 = vmatmul.mubr.f32.gmra.mrb[0].mxu0 %v33
    %v122 = vpop.f32.mrb[0].mxu0
    %v123 = vadd.f32 0.0, %v122
    %v124 = vpop.f32.mrb[0].mxu0
    %v125 = vadd.f32 0.0, %v124
    %126 = vmatprep.mubr.f32.mxu0 0.0
    %127 = vmatmul.mubr.f32.gmra.mrb[0].mxu0 %v36
    %v128 = vpop.f32.mrb[0].mxu0
    %v129 = vadd.f32 0.0, %v128
    %v130 = vpop.f32.mrb[0].mxu0
    %v131 = vadd.f32 0.0, %v130
    %132 = vmatprep.mubr.f32.mxu0 0.0
    %133 = vmatmul.mubr.f32.gmra.mrb[0].mxu0 %v39
    %v134 = vpop.f32.mrb[0].mxu0
    %v135 = vadd.f32 0.0, %v134
    %v136 = vpop.f32.mrb[0].mxu0
    %v137 = vadd.f32 0.0, %v136
    %138 = vmatprep.mubr.f32.mxu0 0.0
    %139 = vmatmul.mubr.f32.gmra.mrb[0].mxu0 %v42
    %v140 = vpop.f32.mrb[0].mxu0
    %v141 = vadd.f32 0.0, %v140
    %v142 = vpop.f32.mrb[0].mxu0
    %v143 = vadd.f32 0.0, %v142
    %144 = vmatprep.mubr.f32.mxu0 0.0
    %145 = vmatmul.mubr.f32.gmra.mrb[0].mxu0 %v45
    %v146 = vpop.f32.mrb[0].mxu0
    %v147 = vadd.f32 0.0, %v146
    %v148 = vpop.f32.mrb[0].mxu0
    %v149 = vadd.f32 0.0, %v148
    %150 = vmatprep.mubr.f32.mxu0 0.0
    %151 = vmatmul.mubr.f32.gmra.mrb[0].mxu0 %v48
    %v152 = vpop.f32.mrb[0].mxu0
    %v153 = vadd.f32 0.0, %v152
    %v154 = vpop.f32.mrb[0].mxu0
    %v155 = vadd.f32 0.0, %v154
    %156 = vmatprep.mubr.f32.mxu0 0.0
    %157 = vmatmul.mubr.f32.gmra.mrb[0].mxu0 %v51
    %v158 = vpop.f32.mrb[0].mxu0
    %v159 = vadd.f32 0.0, %v158
    %v160 = vpop.f32.mrb[0].mxu0
    %v161 = vadd.f32 0.0, %v160
    %162 = vmatprep.mubr.f32.mxu0 0.0
    %163 = vmatmul.mubr.f32.gmra.mrb[0].mxu0 %v54
    %v164 = vpop.f32.mrb[0].mxu0
    %v165 = vadd.f32 0.0, %v164
    %v166 = vpop.f32.mrb[0].mxu0
    %v167 = vadd.f32 0.0, %v166
    %168 = vdwg.mxu0
    %169 = vmax.xlane.f32.xlu0 %v123
    %v170 = vpop.xlane.xlu0 %169
    %171 = vmax.xlane.f32.xlu0 %v129
    %v172 = vpop.xlane.xlu0 %171
    %173 = vmax.xlane.f32.xlu0 %v135
    %v174 = vpop.xlane.xlu0 %173
    %175 = vmax.xlane.f32.xlu0 %v141
    %v176 = vpop.xlane.xlu0 %175
    %177 = vmax.xlane.f32.xlu0 %v147
    %v178 = vpop.xlane.xlu0 %177
    %179 = vmax.xlane.f32.xlu0 %v153
    %v180 = vpop.xlane.xlu0 %179
    %181 = vmax.xlane.f32.xlu0 %v159
    %v182 = vpop.xlane.xlu0 %181
    %183 = vmax.xlane.f32.xlu0 %v165
    %v184 = vpop.xlane.xlu0 %183
    %v185 = vsub.f32 %v123, %v170
    %v186 = vsub.f32 %v129, %v172
    %v187 = vsub.f32 %v135, %v174
    %v188 = vsub.f32 %v141, %v176
    %v189 = vsub.f32 %v147, %v178
    %v190 = vsub.f32 %v153, %v180
    %v191 = vsub.f32 %v159, %v182
    %v192 = vsub.f32 %v165, %v184
    %v193 = vmul.f32 %v185, 1.442695
    %v194 = vpow.pop %v193
    %v195 = vmul.f32 %v186, 1.442695
    %v196 = vpow.pop %v195
    %v197 = vmul.f32 %v187, 1.442695
    %v198 = vpow.pop %v197
    %v199 = vmul.f32 %v188, 1.442695
    %v200 = vpow.pop %v199
    %v201 = vmul.f32 %v189, 1.442695
    %v202 = vpow.pop %v201
    %v203 = vmul.f32 %v190, 1.442695
    %v204 = vpow.pop %v203
    %v205 = vmul.f32 %v191, 1.442695
    %v206 = vpow.pop %v205
    %v207 = vmul.f32 %v192, 1.442695
    %v208 = vpow.pop %v207
    %209 = vadd.xlane.f32.xlu0 %v194
    %v210 = vpop.xlane.xlu0 %209
    %211 = vadd.xlane.f32.xlu0 %v196
    %v212 = vpop.xlane.xlu0 %211
    %213 = vadd.xlane.f32.xlu0 %v198
    %v214 = vpop.xlane.xlu0 %213
    %215 = vadd.xlane.f32.xlu0 %v200
    %v216 = vpop.xlane.xlu0 %215
    %217 = vadd.xlane.f32.xlu0 %v202
    %v218 = vpop.xlane.xlu0 %217
    %219 = vadd.xlane.f32.xlu0 %v204
    %v220 = vpop.xlane.xlu0 %219
    %221 = vadd.xlane.f32.xlu0 %v206
    %v222 = vpop.xlane.xlu0 %221
    %223 = vadd.xlane.f32.xlu0 %v208
    %v224 = vpop.xlane.xlu0 %223
    %v225 = vrcp.pop %v210
    %v226 = vrcp.pop %v212
    %v227 = vrcp.pop %v214
    %v228 = vrcp.pop %v216
    %v229 = vrcp.pop %v218
    %v230 = vrcp.pop %v220
    %v231 = vrcp.pop %v222
    %v232 = vrcp.pop %v224
    %v233 = vmul.f32 %v194, %v225
    %v234 = vmul.f32 %v196, %v226
    %v235 = vmul.f32 %v198, %v227
    %v236 = vmul.f32 %v200, %v228
    %v237 = vmul.f32 %v202, %v229
    %v238 = vmul.f32 %v204, %v230
    %v239 = vmul.f32 %v206, %v231
    %v240 = vmul.f32 %v208, %v232
    %v241 = vrot.slane %v233, 4
    %v242 = vadd.f32 %v233, %v241
    %v243 = vrot.slane %v242, 2
    %v244 = vadd.f32 %v242, %v243
    %v245 = vrot.slane %v244, 1
    %v246 = vadd.f32 %v244, %v245
    %v247 = vrot.slane %v234, 4
    %v248 = vadd.f32 %v234, %v247
    %v249 = vrot.slane %v248, 2
    %v250 = vadd.f32 %v248, %v249
    %v251 = vrot.slane %v250, 1
    %v252 = vadd.f32 %v250, %v251
    %v253 = vrot.slane %v235, 4
    %v254 = vadd.f32 %v235, %v253
    %v255 = vrot.slane %v254, 2
    %v256 = vadd.f32 %v254, %v255
    %v257 = vrot.slane %v256, 1
    %v258 = vadd.f32 %v256, %v257
    %v259 = vrot.slane %v236, 4
    %v260 = vadd.f32 %v236, %v259
    %v261 = vrot.slane %v260, 2
    %v262 = vadd.f32 %v260, %v261
    %v263 = vrot.slane %v262, 1
    %v264 = vadd.f32 %v262, %v263
    %v265 = vrot.slane %v237, 4
    %v266 = vadd.f32 %v237, %v265
    %v267 = vrot.slane %v266, 2
    %v268 = vadd.f32 %v266, %v267
    %v269 = vrot.slane %v268, 1
    %v270 = vadd.f32 %v268, %v269
    %v271 = vrot.slane %v238, 4
    %v272 = vadd.f32 %v238, %v271
    %v273 = vrot.slane %v272, 2
    %v274 = vadd.f32 %v272, %v273
    %v275 = vrot.slane %v274, 1
    %v276 = vadd.f32 %v274, %v275
    %v277 = vrot.slane %v239, 4
    %v278 = vadd.f32 %v239, %v277
    %v279 = vrot.slane %v278, 2
    %v280 = vadd.f32 %v278, %v279
    %v281 = vrot.slane %v280, 1
    %v282 = vadd.f32 %v280, %v281
    %v283 = vrot.slane %v240, 4
    %v284 = vadd.f32 %v240, %v283
    %v285 = vrot.slane %v284, 2
    %v286 = vadd.f32 %v284, %v285
    %v287 = vrot.slane %v286, 1
    %v288 = vadd.f32 %v286, %v287
    %v289 = vadd.f32 %v246, 1e-06
    %v290 = vadd.f32 %v252, 1e-06
    %v291 = vadd.f32 %v258, 1e-06
    %v292 = vadd.f32 %v264, 1e-06
    %v293 = vadd.f32 %v270, 1e-06
    %v294 = vadd.f32 %v276, 1e-06
    %v295 = vadd.f32 %v282, 1e-06
    %v296 = vadd.f32 %v288, 1e-06
    %v297 = vrcp.pop %v289
    %v298 = vrcp.pop %v290
    %v299 = vrcp.pop %v291
    %v300 = vrcp.pop %v292
    %v301 = vrcp.pop %v293
    %v302 = vrcp.pop %v294
    %v303 = vrcp.pop %v295
    %v304 = vrcp.pop %v296
    %v305 = vmul.f32 %v233, %v297
    %v306 = vmul.f32 %v234, %v298
    %v307 = vmul.f32 %v235, %v299
    %v308 = vmul.f32 %v236, %v300
    %v309 = vmul.f32 %v237, %v301
    %v310 = vmul.f32 %v238, %v302
    %v311 = vmul.f32 %v239, %v303
    %v312 = vmul.f32 %v240, %v304
    %313 = vmax.xlane.f32.xlu0 %v125
    %v314 = vpop.xlane.xlu0 %313
    %315 = vmax.xlane.f32.xlu0 %v131
    %v316 = vpop.xlane.xlu0 %315
    %317 = vmax.xlane.f32.xlu0 %v137
    %v318 = vpop.xlane.xlu0 %317
    %319 = vmax.xlane.f32.xlu0 %v143
    %v320 = vpop.xlane.xlu0 %319
    %321 = vmax.xlane.f32.xlu0 %v149
    %v322 = vpop.xlane.xlu0 %321
    %323 = vmax.xlane.f32.xlu0 %v155
    %v324 = vpop.xlane.xlu0 %323
    %325 = vmax.xlane.f32.xlu0 %v161
    %v326 = vpop.xlane.xlu0 %325
    %327 = vmax.xlane.f32.xlu0 %v167
    %v328 = vpop.xlane.xlu0 %327
    %v329 = vsub.f32 %v125, %v314
    %v330 = vsub.f32 %v131, %v316
    %v331 = vsub.f32 %v137, %v318
    %v332 = vsub.f32 %v143, %v320
    %v333 = vsub.f32 %v149, %v322
    %v334 = vsub.f32 %v155, %v324
    %v335 = vsub.f32 %v161, %v326
    %v336 = vsub.f32 %v167, %v328
    %v337 = vmul.f32 %v329, 1.442695
    %v338 = vpow.pop %v337
    %v339 = vmul.f32 %v330, 1.442695
    %v340 = vpow.pop %v339
    %v341 = vmul.f32 %v331, 1.442695
    %v342 = vpow.pop %v341
    %v343 = vmul.f32 %v332, 1.442695
    %v344 = vpow.pop %v343
    %v345 = vmul.f32 %v333, 1.442695
    %v346 = vpow.pop %v345
    %v347 = vmul.f32 %v334, 1.442695
    %v348 = vpow.pop %v347
    %v349 = vmul.f32 %v335, 1.442695
    %v350 = vpow.pop %v349
    %v351 = vmul.f32 %v336, 1.442695
    %v352 = vpow.pop %v351
    %353 = vadd.xlane.f32.xlu0 %v338
    %v354 = vpop.xlane.xlu0 %353
    %355 = vadd.xlane.f32.xlu0 %v340
    %v356 = vpop.xlane.xlu0 %355
    %357 = vadd.xlane.f32.xlu0 %v342
    %v358 = vpop.xlane.xlu0 %357
    %359 = vadd.xlane.f32.xlu0 %v344
    %v360 = vpop.xlane.xlu0 %359
    %361 = vadd.xlane.f32.xlu0 %v346
    %v362 = vpop.xlane.xlu0 %361
    %363 = vadd.xlane.f32.xlu0 %v348
    %v364 = vpop.xlane.xlu0 %363
    %365 = vadd.xlane.f32.xlu0 %v350
    %v366 = vpop.xlane.xlu0 %365
    %367 = vadd.xlane.f32.xlu0 %v352
    %v368 = vpop.xlane.xlu0 %367
    %v369 = vrcp.pop %v354
    %v370 = vrcp.pop %v356
    %v371 = vrcp.pop %v358
    %v372 = vrcp.pop %v360
    %v373 = vrcp.pop %v362
    %v374 = vrcp.pop %v364
    %v375 = vrcp.pop %v366
    %v376 = vrcp.pop %v368
    %v377 = vmul.f32 %v338, %v369
    %v378 = vmul.f32 %v340, %v370
    %v379 = vmul.f32 %v342, %v371
    %v380 = vmul.f32 %v344, %v372
    %v381 = vmul.f32 %v346, %v373
    %v382 = vmul.f32 %v348, %v374
    %v383 = vmul.f32 %v350, %v375
    %v384 = vmul.f32 %v352, %v376
    %v385 = vrot.slane %v377, 4
    %v386 = vadd.f32 %v377, %v385
    %v387 = vrot.slane %v386, 2
    %v388 = vadd.f32 %v386, %v387
    %v389 = vrot.slane %v388, 1
    %v390 = vadd.f32 %v388, %v389
    %v391 = vrot.slane %v378, 4
    %v392 = vadd.f32 %v378, %v391
    %v393 = vrot.slane %v392, 2
    %v394 = vadd.f32 %v392, %v393
    %v395 = vrot.slane %v394, 1
    %v396 = vadd.f32 %v394, %v395
    %v397 = vrot.slane %v379, 4
    %v398 = vadd.f32 %v379, %v397
    %v399 = vrot.slane %v398, 2
    %v400 = vadd.f32 %v398, %v399
    %v401 = vrot.slane %v400, 1
    %v402 = vadd.f32 %v400, %v401
    %v403 = vrot.slane %v380, 4
    %v404 = vadd.f32 %v380, %v403
    %v405 = vrot.slane %v404, 2
    %v406 = vadd.f32 %v404, %v405
    %v407 = vrot.slane %v406, 1
    %v408 = vadd.f32 %v406, %v407
    %v409 = vrot.slane %v381, 4
    %v410 = vadd.f32 %v381, %v409
    %v411 = vrot.slane %v410, 2
    %v412 = vadd.f32 %v410, %v411
    %v413 = vrot.slane %v412, 1
    %v414 = vadd.f32 %v412, %v413
    %v415 = vrot.slane %v382, 4
    %v416 = vadd.f32 %v382, %v415
    %v417 = vrot.slane %v416, 2
    %v418 = vadd.f32 %v416, %v417
    %v419 = vrot.slane %v418, 1
    %v420 = vadd.f32 %v418, %v419
    %v421 = vrot.slane %v383, 4
    %v422 = vadd.f32 %v383, %v421
    %v423 = vrot.slane %v422, 2
    %v424 = vadd.f32 %v422, %v423
    %v425 = vrot.slane %v424, 1
    %v426 = vadd.f32 %v424, %v425
    %v427 = vrot.slane %v384, 4
    %v428 = vadd.f32 %v384, %v427
    %v429 = vrot.slane %v428, 2
    %v430 = vadd.f32 %v428, %v429
    %v431 = vrot.slane %v430, 1
    %v432 = vadd.f32 %v430, %v431
    %v433 = vadd.f32 %v390, 1e-06
    %v434 = vadd.f32 %v396, 1e-06
    %v435 = vadd.f32 %v402, 1e-06
    %v436 = vadd.f32 %v408, 1e-06
    %v437 = vadd.f32 %v414, 1e-06
    %v438 = vadd.f32 %v420, 1e-06
    %v439 = vadd.f32 %v426, 1e-06
    %v440 = vadd.f32 %v432, 1e-06
    %v441 = vrcp.pop %v433
    %v442 = vrcp.pop %v434
    %v443 = vrcp.pop %v435
    %v444 = vrcp.pop %v436
    %v445 = vrcp.pop %v437
    %v446 = vrcp.pop %v438
    %v447 = vrcp.pop %v439
    %v448 = vrcp.pop %v440
    %v449 = vmul.f32 %v377, %v441
    %v450 = vmul.f32 %v378, %v442
    %v451 = vmul.f32 %v379, %v443
    %v452 = vmul.f32 %v380, %v444
    %v453 = vmul.f32 %v381, %v445
    %v454 = vmul.f32 %v382, %v446
    %v455 = vmul.f32 %v383, %v447
    %v456 = vmul.f32 %v384, %v448
    %v457 = vld [vmem:[%s2] sm:$0xff]
    %v458 = vld [vmem:[%s2 + $0x8] sm:$0xff]
    %v459 = vld [vmem:[%s2 + $0x10] sm:$0xff]
    %v460 = vld [vmem:[%s2 + $0x18] sm:$0xff]
    %vm461 = vcmask 523264
    %v463 = vsel %vm461, %v457, 0
    %v466 = vsel %vm461, %v458, 0
    %v469 = vsel %vm461, %v459, 0
    %v472 = vsel %vm461, %v460, 0
    %474 = vmatprep.subr.mxu0 %v449
    %475 = vmatpush1.msra.mxu0 %v305
    %476 = vmatprep.subr.mxu0 %v450
    %477 = vmatpush1.msra.mxu0 %v306
    %478 = vmatprep.subr.mxu0 %v451
    %479 = vmatpush1.msra.mxu0 %v307
    %480 = vmatprep.subr.mxu0 %v452
    %481 = vmatpush1.msra.mxu0 %v308
    %482 = vmatprep.subr.mxu0 %v453
    %483 = vmatpush1.msra.mxu0 %v309
    %484 = vmatprep.subr.mxu0 %v454
    %485 = vmatpush1.msra.mxu0 %v310
    %486 = vmatprep.subr.mxu0 %v455
    %487 = vmatpush1.msra.mxu0 %v311
    %488 = vmatprep.subr.mxu0 %v456
    %489 = vmatpush1.msra.mxu0 %v312
    %490 = vmatprep.subr.mxu0 0.0
    %491 = vmatpush1.msra.mxu0 0.0
    %492 = vmatprep.subr.mxu0 0.0
    %493 = vmatpush1.msra.mxu0 0.0
    %494 = vmatprep.subr.mxu0 0.0
    %495 = vmatpush1.msra.mxu0 0.0
    %496 = vmatprep.subr.mxu0 0.0
    %497 = vmatpush1.msra.mxu0 0.0
    %498 = vmatprep.subr.mxu0 0.0
    %499 = vmatpush1.msra.mxu0 0.0
    %500 = vmatprep.subr.mxu0 0.0
    %501 = vmatpush1.msra.mxu0 0.0
    %502 = vmatprep.subr.mxu0 0.0
    %503 = vmatpush1.msra.mxu0 0.0
    %504 = vmatprep.subr.mxu0 0.0
    %505 = vmatpush1.msra.mxu0 0.0
    %506 = vmatprep.subr.mxu0 0.0
    %507 = vmatpush1.msra.mxu0 0.0
    %508 = vmatprep.subr.mxu0 0.0
    %509 = vmatpush1.msra.mxu0 0.0
    %510 = vmatprep.subr.mxu0 0.0
    %511 = vmatpush1.msra.mxu0 0.0
    %512 = vmatprep.subr.mxu0 0.0
    %513 = vmatpush1.msra.mxu0 0.0
    %514 = vmatprep.subr.mxu0 0.0
    %515 = vmatpush1.msra.mxu0 0.0
    %516 = vmatprep.subr.mxu0 0.0
    %517 = vmatpush1.msra.mxu0 0.0
    %518 = vmatprep.subr.mxu0 0.0
    %519 = vmatpush1.msra.mxu0 0.0
    %520 = vmatprep.subr.mxu0 0.0
    %521 = vmatpush1.msra.mxu0 0.0
    %522 = vmatprep.subr.mxu0 0.0
    %523 = vmatpush1.msra.mxu0 0.0
    %524 = vmatprep.subr.mxu0 0.0
    %525 = vmatpush1.msra.mxu0 0.0
    %526 = vmatprep.subr.mxu0 0.0
    %527 = vmatpush1.msra.mxu0 0.0
    %528 = vmatprep.subr.mxu0 0.0
    %529 = vmatpush1.msra.mxu0 0.0
    %530 = vmatprep.subr.mxu0 0.0
    %531 = vmatpush1.msra.mxu0 0.0
    %532 = vmatprep.subr.mxu0 0.0
    %533 = vmatpush1.msra.mxu0 0.0
    %534 = vmatprep.subr.mxu0 0.0
    %535 = vmatpush1.msra.mxu0 0.0
    %536 = vmatprep.subr.mxu0 0.0
    %537 = vmatpush1.msra.mxu0 0.0
    %538 = vmatprep.mubr.f32.mxu0 0.0
    %539 = vmatmul.mubr.f32.gmra.mrb[0].mxu0 %v463
    %v540 = vpop.f32.mrb[0].mxu0
    %v541 = vadd.f32 0.0, %v540
    %v542 = vpop.f32.mrb[0].mxu0
    %v543 = vadd.f32 0.0, %v542
    %544 = vmatprep.mubr.f32.mxu0 0.0
    %545 = vmatmul.mubr.f32.gmra.mrb[0].mxu0 %v466
    %v546 = vpop.f32.mrb[0].mxu0
    %v547 = vadd.f32 0.0, %v546
    %v548 = vpop.f32.mrb[0].mxu0
    %v549 = vadd.f32 0.0, %v548
    %550 = vmatprep.mubr.f32.mxu0 0.0
    %551 = vmatmul.mubr.f32.gmra.mrb[0].mxu0 %v469
    %v552 = vpop.f32.mrb[0].mxu0
    %v553 = vadd.f32 0.0, %v552
    %v554 = vpop.f32.mrb[0].mxu0
    %v555 = vadd.f32 0.0, %v554
    %556 = vmatprep.mubr.f32.mxu0 0.0
    %557 = vmatmul.mubr.f32.gmra.mrb[0].mxu0 %v472
    %v558 = vpop.f32.mrb[0].mxu0
    %v559 = vadd.f32 0.0, %v558
    %v560 = vpop.f32.mrb[0].mxu0
    %v561 = vadd.f32 0.0, %v560
    %562 = vdwg.mxu0
    %563 = vst [vmem:[#allocation2] sm:$0xff] %v541
    %564 = vst [vmem:[#allocation2 + $0x8] sm:$0xff] %v543
    %565 = vst [vmem:[#allocation2 + $0x10] sm:$0xff] %v547
    %566 = vst [vmem:[#allocation2 + $0x18] sm:$0xff] %v549
    %567 = vst [vmem:[#allocation2 + $0x20] sm:$0xff] %v553
    %568 = vst [vmem:[#allocation2 + $0x28] sm:$0xff] %v555
    %569 = vst [vmem:[#allocation2 + $0x30] sm:$0xff] %v559
    %570 = vst [vmem:[#allocation2 + $0x38] sm:$0xff] %v561
    // Predicated region
    $region14: #{tpu_custom_call.1} parent=1 // pred_check
      _
    $region15: #{tpu_custom_call.1} parent=1 // pred_check_branch
      %572 = sbr.rel (0) target = $region17
    $region16: #{tpu_custom_call.1} parent=1 // pred_region
      %s574 = ssub.s32 1024, 1024
      %575 = vsyncadd [#allocation3], %s574
      %s576 = sshll.u32 [#allocation2], 4
      %s577 = int_to_ptr.vmem [resolvable:$true] %s576
      %582 = dma.vmem_to_hbm [thread:$0]  %s577, 1024, %s3, [#allocation3], 256, 256, 16
    $region17: #{tpu_custom_call.1} parent=1 // pred_fallthru
      _
    // Predicated region
    $region18: #{tpu_custom_call.1} parent=1 // pred_check
      _
    $region19: #{tpu_custom_call.1} parent=1 // pred_check_branch
      %584 = sbr.rel (0) target = $region21
    $region20: #{tpu_custom_call.1} parent=1 // pred_region
      %585 = dma.done [#allocation3], 1024
    $region21: #{tpu_custom_call.1} parent=1 // pred_fallthru
      _
    %586 = vsyncpa [#allocation3], 1

</llo_original>
